<compile_context>
chip_gen: v5e
topology: v5e:2x2
jax: 0.10.0
libtpu: 0.0.40
codegen_flags: <defaults>
</compile_context>

<pallas_src>
import functools

import jax
import jax.numpy as jnp
from jax.experimental import pallas as pl
from jax.experimental.pallas import tpu as pltpu

GAMMA = 2.0  # focusing parameter (static; gamma == 2 -> explicit square)


def _round_up(x, m):
    return ((x + m - 1) // m) * m


def _focal_loss_kernel(logits_ref, target_ref, alpha_ref, out_ref, *,
                       n_rows, tile_n):
    """One (tile_n, C) tile -> per-tile partial loss sum.

    logits_ref: (tile_n, C) native dtype
    target_ref: (tile_n, 1) int32 class index
    alpha_ref : (tile_n, 1) f32 per-row class weight
    out_ref   : (1, 8, 128) f32, filled with the tile's loss sum
    """
    i = pl.program_id(0)

    x = logits_ref[...].astype(jnp.float32)                      # (T, C)
    t = target_ref[...]                                          # (T, 1) i32
    alpha = alpha_ref[...]                                       # (T, 1) f32

    # Row-validity mask for the ragged final tile (no wrapper-side padding of
    # the logits).  Zero invalid rows up front so undefined edge-block
    # contents can never produce NaN/Inf.
    row = jax.lax.broadcasted_iota(jnp.int32, (tile_n, 1), 0) + i * tile_n
    valid = row < n_rows                                         # (T, 1) bool
    x = jnp.where(valid, x, 0.0)

    # log_softmax pieces along the class (lane) axis; target gather reads raw
    # x so no separate `shifted` temporary is needed for it.
    m = jnp.max(x, axis=1, keepdims=True)                        # (T, 1)
    col = jax.lax.broadcasted_iota(jnp.int32, x.shape, 1)        # (T, C)
    x_t = jnp.sum(jnp.where(col == t, x, 0.0), axis=1, keepdims=True)
    lse = jnp.log(jnp.sum(jnp.exp(x - m), axis=1, keepdims=True))  # (T, 1)

    logp_t = (x_t - m) - lse                                     # (T, 1)
    p_t = jnp.exp(logp_t)                                        # (T, 1)

    one_minus = 1.0 - p_t
    loss = -(one_minus * one_minus) * alpha * logp_t             # gamma == 2

    loss = jnp.where(valid, loss, 0.0)                           # mask pad rows
    s = jnp.sum(loss)

    # Lane-dense partial-sum block; wrapper reads [i, 0, 0] per tile.
    out_ref[...] = jnp.full(out_ref.shape, s, dtype=jnp.float32)


@jax.jit
def focal_loss(logits, target, class_weights):
    """logits: (N, C) float, target: (N,) int, class_weights: (C,) float -> scalar f32."""
    n, c = logits.shape

    # --- tile sizing -------------------------------------------------------
    # VMEM working set is lane-padded to 128 lanes regardless of true C, so
    # budget the f32 block at ~2 MiB in lane-padded terms.  With ~4-5x f32
    # temporaries plus the double-buffered native-dtype input this stays well
    # under the 48 MiB limit set below on every generation.
    c_lanes = max(128, _round_up(c, 128))
    budget = 2 * 1024 * 1024
    tile_n = budget // (c_lanes * 4)
    tile_n = max(8, min(tile_n, 4096))
    tile_n = (tile_n // 8) * 8

    n_ceil8 = _round_up(n, 8)
    # v7x has 2 TensorCores; keep at least 2 grid steps whenever N allows so
    # the "parallel" batch axis shards across both.  Neutral on v5e/v6e.
    if n_ceil8 > 8:
        tile_n = min(tile_n, _round_up((n_ceil8 + 1) // 2, 8))
    tile_n = min(tile_n, n_ceil8)

    num_tiles = pl.cdiv(n, tile_n)
    n_pad = num_tiles * tile_n

    # --- small (N,) side inputs -------------------------------------------
    target_i = target.astype(jnp.int32)
    target_p = jnp.pad(target_i, (0, n_pad - n)).reshape(n_pad, 1)

    # Hoisted alpha gather (cheap (N,) gather); pad rows are masked in-kernel
    # anyway, so the pad value here is irrelevant.
    alpha = class_weights.astype(jnp.float32)[target_i]
    alpha_p = jnp.pad(alpha, (0, n_pad - n)).reshape(n_pad, 1)

    kernel = functools.partial(_focal_loss_kernel, n_rows=n, tile_n=tile_n)

    partial = pl.pallas_call(
        kernel,
        out_shape=jax.ShapeDtypeStruct((num_tiles, 8, 128), jnp.float32),
        grid=(num_tiles,),
        in_specs=[
            # Full-extent (unpadded) class axis; ragged N handled in-kernel.
            pl.BlockSpec((tile_n, c), lambda i: (i, 0)),
            pl.BlockSpec((tile_n, 1), lambda i: (i, 0)),
            pl.BlockSpec((tile_n, 1), lambda i: (i, 0)),
        ],
        out_specs=pl.BlockSpec((1, 8, 128), lambda i: (i, 0, 0)),
        compiler_params=pltpu.CompilerParams(
            dimension_semantics=("parallel",),
            vmem_limit_bytes=48 * 1024 * 1024,
        ),
    )(logits, target_p, alpha_p)

    total = jnp.sum(partial[:, 0, 0])
    return total / jnp.float32(n)   # reduction = 'mean' over the true N


def _focal_loss_ref(logits, target, class_weights, gamma=GAMMA):
    log_probs = jax.nn.log_softmax(logits.astype(jnp.float32), axis=1)
    probs = jnp.exp(log_probs)
    n = logits.shape[0]
    p_t = probs[jnp.arange(n), target][:, None]
    logp_t = log_probs[jnp.arange(n), target][:, None]
    fw = (1.0 - p_t) ** gamma
    alpha = class_weights[target][:, None]
    loss = -fw * alpha * logp_t
    return jnp.mean(loss)


if __name__ == "__main__":
    key = jax.random.PRNGKey(0)
    k1, k2 = jax.random.split(key)

    # Small shapes that exercise the ragged row tile (N not a multiple of 8)
    # and a class count far below 128 lanes.
    N, C = 37, 10
    logits = jax.random.normal(k1, (N, C), dtype=jnp.float32)
    target = jax.random.randint(k2, (N,), 0, C, dtype=jnp.int32)
    class_weights = jnp.linspace(0.5, 1.5, C, dtype=jnp.float32)

    out = focal_loss(logits, target, class_weights)
    jax.block_until_ready(out)

    ref = _focal_loss_ref(logits, target, class_weights)
    assert jnp.allclose(out, ref, rtol=1e-5, atol=1e-6), (out, ref)

    print("KERNEL_OK")
</pallas_src>

<mosaic_0001>
module attributes {stable_mosaic.version = 11 : i64} {
  func.func @_focal_loss_kernel(%arg0: i32, %arg1: memref<24x10xf32, #tpu.memory_space<vmem>>, %arg2: memref<24x1xi32, #tpu.memory_space<vmem>>, %arg3: memref<24x1xf32, #tpu.memory_space<vmem>>, %arg4: memref<1x8x128xf32, #tpu.memory_space<vmem>>) attributes {dimension_semantics = [#tpu.dimension_semantics<parallel>], iteration_bounds = array<i64: 2>, scalar_prefetch = 0 : i64, scratch_operands = 0 : i64, tpu.core_type = #tpu.core_type<tc>, window_params = [{transform_indices = @transform_0, window_bounds = array<i64: 24, 10>}, {transform_indices = @transform_1, window_bounds = array<i64: 24, 1>}, {transform_indices = @transform_2, window_bounds = array<i64: 24, 1>}, {transform_indices = @transform_3, window_bounds = array<i64: 1, 8, 128>}]} {
    %c0 = arith.constant 0 : index
    %c0_0 = arith.constant 0 : index
    %0 = vector.load %arg1[%c0, %c0_0] : memref<24x10xf32, #tpu.memory_space<vmem>>, vector<24x10xf32>
    %c0_1 = arith.constant 0 : index
    %c0_2 = arith.constant 0 : index
    %1 = vector.load %arg2[%c0_1, %c0_2] : memref<24x1xi32, #tpu.memory_space<vmem>>, vector<24x1xi32>
    %c0_3 = arith.constant 0 : index
    %c0_4 = arith.constant 0 : index
    %2 = vector.load %arg3[%c0_3, %c0_4] : memref<24x1xf32, #tpu.memory_space<vmem>>, vector<24x1xf32>
    %3 = tpu.iota {dimensions = array<i32: 0>} : vector<24x1xi32>
    %c24_i32 = arith.constant 24 : i32
    %4 = arith.muli %arg0, %c24_i32 : i32
    %5 = vector.broadcast %4 : i32 to vector<24x1xi32>
    %6 = arith.addi %3, %5 : vector<24x1xi32>
    %c37_i32 = arith.constant 37 : i32
    %7 = vector.broadcast %c37_i32 : i32 to vector<24x1xi32>
    %8 = arith.cmpi slt, %6, %7 : vector<24x1xi32>
    %cst = arith.constant 0.000000e+00 : f32
    %9 = vector.shape_cast %8 : vector<24x1xi1> to vector<24x1xi1>
    %10 = vector.broadcast %9 : vector<24x1xi1> to vector<24x10xi1>
    %11 = vector.broadcast %cst : f32 to vector<24x10xf32>
    %12 = arith.select %10, %0, %11 : vector<24x10xi1>, vector<24x10xf32>
    %cst_5 = arith.constant dense<0xFF800000> : vector<24xf32>
    %13 = vector.multi_reduction <maximumf>, %12, %cst_5 [1] : vector<24x10xf32> to vector<24xf32>
    %14 = vector.shape_cast %13 : vector<24xf32> to vector<24x1xf32>
    %15 = tpu.iota {dimensions = array<i32: 1>} : vector<24x10xi32>
    %16 = vector.broadcast %1 : vector<24x1xi32> to vector<24x10xi32>
    %17 = arith.cmpi eq, %15, %16 : vector<24x10xi32>
    %cst_6 = arith.constant 0.000000e+00 : f32
    %18 = vector.broadcast %cst_6 : f32 to vector<24x10xf32>
    %19 = arith.select %17, %12, %18 : vector<24x10xi1>, vector<24x10xf32>
    %cst_7 = arith.constant dense<0.000000e+00> : vector<24xf32>
    %20 = vector.multi_reduction <add>, %19, %cst_7 [1] : vector<24x10xf32> to vector<24xf32>
    %21 = vector.shape_cast %20 : vector<24xf32> to vector<24x1xf32>
    %22 = vector.broadcast %14 : vector<24x1xf32> to vector<24x10xf32>
    %23 = arith.subf %12, %22 : vector<24x10xf32>
    %24 = math.exp %23 : vector<24x10xf32>
    %cst_8 = arith.constant dense<0.000000e+00> : vector<24xf32>
    %25 = vector.multi_reduction <add>, %24, %cst_8 [1] : vector<24x10xf32> to vector<24xf32>
    %26 = vector.shape_cast %25 : vector<24xf32> to vector<24x1xf32>
    %27 = math.log %26 : vector<24x1xf32>
    %28 = arith.subf %21, %14 : vector<24x1xf32>
    %29 = arith.subf %28, %27 : vector<24x1xf32>
    %30 = math.exp %29 : vector<24x1xf32>
    %cst_9 = arith.constant 1.000000e+00 : f32
    %31 = vector.broadcast %cst_9 : f32 to vector<24x1xf32>
    %32 = arith.subf %31, %30 : vector<24x1xf32>
    %33 = arith.mulf %32, %32 : vector<24x1xf32>
    %cst_10 = arith.constant 0.000000e+00 : f32
    %34 = vector.broadcast %cst_10 : f32 to vector<24x1xf32>
    %35 = arith.subf %34, %33 : vector<24x1xf32>
    %36 = arith.mulf %35, %2 : vector<24x1xf32>
    %37 = arith.mulf %36, %29 : vector<24x1xf32>
    %cst_11 = arith.constant 0.000000e+00 : f32
    %38 = vector.broadcast %cst_11 : f32 to vector<24x1xf32>
    %39 = arith.select %8, %37, %38 : vector<24x1xi1>, vector<24x1xf32>
    %40 = vector.shape_cast %39 : vector<24x1xf32> to vector<1x24x1xf32>
    %cst_12 = arith.constant dense<0.000000e+00> : vector<1xf32>
    %41 = vector.multi_reduction <add>, %40, %cst_12 [1, 2] : vector<1x24x1xf32> to vector<1xf32>
    %42 = vector.shape_cast %41 : vector<1xf32> to vector<1x1x1xf32>
    %43 = vector.extract %42[0, 0, 0] : f32 from vector<1x1x1xf32>
    %44 = vector.broadcast %43 : f32 to vector<1x8x128xf32>
    %c0_13 = arith.constant 0 : index
    %c0_14 = arith.constant 0 : index
    %c0_15 = arith.constant 0 : index
    %45 = vector.load %arg4[%c0_13, %c0_14, %c0_15] : memref<1x8x128xf32, #tpu.memory_space<vmem>>, vector<1x8x128xf32>
    tpu.vector_store %arg4[%c0_13, %c0_14, %c0_15], %44 {strides = array<i32>} : memref<1x8x128xf32, #tpu.memory_space<vmem>>, vector<1x8x128xf32>,
    return
  }
  func.func @transform_0(%arg0: i32) -> (i32, i32) {
    %c0_i32 = arith.constant 0 : i32
    %c0_i32_0 = arith.constant 0 : i32
    return %arg0, %c0_i32 : i32, i32
  }
  func.func @transform_1(%arg0: i32) -> (i32, i32) {
    %c0_i32 = arith.constant 0 : i32
    %c0_i32_0 = arith.constant 0 : i32
    return %arg0, %c0_i32 : i32, i32
  }
  func.func @transform_2(%arg0: i32) -> (i32, i32) {
    %c0_i32 = arith.constant 0 : i32
    %c0_i32_0 = arith.constant 0 : i32
    return %arg0, %c0_i32 : i32, i32
  }
  func.func @transform_3(%arg0: i32) -> (i32, i32, i32) {
    %c0_i32 = arith.constant 0 : i32
    %c0_i32_0 = arith.constant 0 : i32
    %c0_i32_1 = arith.constant 0 : i32
    return %arg0, %c0_i32, %c0_i32_0 : i32, i32, i32
  }
}

</mosaic_0001>

<llo_original>
// kernel: focal_loss.1
$region0: #{focal_loss.1}
  #allocation0 [shape = 'u32[]', space=smem, size = 0x4, offset = 0x4, fixed_abs, tag = 'smem constant byte address 0x4 - core index']
  #allocation1 [shape = 'u32[72,128]{1,0:T(1,128)}', space=vmem, size = 0x9000, scoped, tag = 'internal scratch']
  %s0 = inlined_call_operand.vmem [shape: f32[37,10], index: 0, kind: input, shape index: {}]
  %s1 = inlined_call_operand.vmem [shape: s32[48,1], index: 1, kind: input, shape index: {}]
  %s2 = inlined_call_operand.vmem [shape: f32[48,1], index: 2, kind: input, shape index: {}]
  %s3 = inlined_call_operand.vmem [shape: f32[2,8,128], index: 3, kind: output, shape index: {}]
  %s4 = sld [smem:[#allocation0]]
  $region45: #{focal_loss.1} parent=0
    _
  %s6 = ssub.s32 1, %s4
  %s7 = scalar_select 0, %s6, %s4
  loop: start=0, step=1, limit=4
  $region2: #{focal_loss.1} parent=0 // loop_pre_header
    _
  $region3: #{focal_loss.1} parent=0 // loop_header
    %s9 = sphi 0, %s13
    %p10 = scmp.ge.s32.totalorder %s9, 4
    %s19 = sphi 0, %s21
    %s22 = sphi 0, %s19
    %s23 = sphi 0, %s22
    %s39 = sphi 0, %s23
    %s45 = sphi 0, %s47
    %s48 = sphi 0, %s45
    %s49 = sphi 0, %s48
    %s65 = sphi 0, %s49
    %s71 = sphi 0, %s73
    %s74 = sphi 0, %s71
    %s75 = sphi 0, %s74
    %s91 = sphi 0, %s75
    %s97 = sphi 0, %s99
    %s100 = sphi 0, %s97
    %s101 = sphi 0, %s100
    %s117 = sphi 0, %s101
  $region4: #{focal_loss.1} parent=0 // loop_header_branch
    %12 = sbr.rel (%p10) target = $region8
  $region5: #{focal_loss.1} parent=0 // loop_body
    %s14 = ssub.s32 %s9, 1
    %s15 = ssub.s32 %s9, 2
    %s16 = sadd.s32 %s9, 1
    %s17 = ssub.s32 %s9, %s16
    %p18 = scmp.eq.s32.totalorder %s17, 0
    %s20 = sadd.s32 %s19, 1
    %s21 = scalar_select %p18, %s19, %s20
    %p24 = pneg %p18
    %p25 = scmp.eq.s32.totalorder %s9, 1
    %p26 = por %p24, %p25
    %p27 = scmp.ne.s32.totalorder %s19, %s22
    %p28 = scmp.eq.s32.totalorder %s9, 0
    %p29 = por %p27, %p28
    %p30 = scmp.ne.s32.totalorder %s19, %s22
    %p31 = scmp.eq.s32.totalorder %s14, 1
    %p32 = por %p30, %p31
    %p33 = scmp.ne.s32.totalorder %s22, %s23
    %p34 = scmp.eq.s32.totalorder %s14, 0
    %p35 = por %p33, %p34
    %p36 = scmp.ne.s32.totalorder %s22, %s23
    %p37 = scmp.eq.s32.totalorder %s15, 1
    %p38 = por %p36, %p37
    %p40 = scmp.ne.s32.totalorder %s23, %s39
    %p41 = scmp.eq.s32.totalorder %s15, 0
    %p42 = por %p40, %p41
    %s43 = ssub.s32 %s9, %s16
    %p44 = scmp.eq.s32.totalorder %s43, 0
    %s46 = sadd.s32 %s45, 1
    %s47 = scalar_select %p44, %s45, %s46
    %p50 = pneg %p44
    %p51 = scmp.eq.s32.totalorder %s9, 1
    %p52 = por %p50, %p51
    %p53 = scmp.ne.s32.totalorder %s45, %s48
    %p54 = scmp.eq.s32.totalorder %s9, 0
    %p55 = por %p53, %p54
    %p56 = scmp.ne.s32.totalorder %s45, %s48
    %p57 = scmp.eq.s32.totalorder %s14, 1
    %p58 = por %p56, %p57
    %p59 = scmp.ne.s32.totalorder %s48, %s49
    %p60 = scmp.eq.s32.totalorder %s14, 0
    %p61 = por %p59, %p60
    %p62 = scmp.ne.s32.totalorder %s48, %s49
    %p63 = scmp.eq.s32.totalorder %s15, 1
    %p64 = por %p62, %p63
    %p66 = scmp.ne.s32.totalorder %s49, %s65
    %p67 = scmp.eq.s32.totalorder %s15, 0
    %p68 = por %p66, %p67
    %s69 = ssub.s32 %s9, %s16
    %p70 = scmp.eq.s32.totalorder %s69, 0
    %s72 = sadd.s32 %s71, 1
    %s73 = scalar_select %p70, %s71, %s72
    %p76 = pneg %p70
    %p77 = scmp.eq.s32.totalorder %s9, 1
    %p78 = por %p76, %p77
    %p79 = scmp.ne.s32.totalorder %s71, %s74
    %p80 = scmp.eq.s32.totalorder %s9, 0
    %p81 = por %p79, %p80
    %p82 = scmp.ne.s32.totalorder %s71, %s74
    %p83 = scmp.eq.s32.totalorder %s14, 1
    %p84 = por %p82, %p83
    %p85 = scmp.ne.s32.totalorder %s74, %s75
    %p86 = scmp.eq.s32.totalorder %s14, 0
    %p87 = por %p85, %p86
    %p88 = scmp.ne.s32.totalorder %s74, %s75
    %p89 = scmp.eq.s32.totalorder %s15, 1
    %p90 = por %p88, %p89
    %p92 = scmp.ne.s32.totalorder %s75, %s91
    %p93 = scmp.eq.s32.totalorder %s15, 0
    %p94 = por %p92, %p93
    %s95 = ssub.s32 %s9, %s16
    %p96 = scmp.eq.s32.totalorder %s95, 0
    %s98 = sadd.s32 %s97, 1
    %s99 = scalar_select %p96, %s97, %s98
    %p102 = pneg %p96
    %p103 = scmp.eq.s32.totalorder %s9, 1
    %p104 = por %p102, %p103
    %p105 = scmp.ne.s32.totalorder %s97, %s100
    %p106 = scmp.eq.s32.totalorder %s9, 0
    %p107 = por %p105, %p106
    %p108 = scmp.ne.s32.totalorder %s97, %s100
    %p109 = scmp.eq.s32.totalorder %s14, 1
    %p110 = por %p108, %p109
    %p111 = scmp.ne.s32.totalorder %s100, %s101
    %p112 = scmp.eq.s32.totalorder %s14, 0
    %p113 = por %p111, %p112
    %p114 = scmp.ne.s32.totalorder %s100, %s101
    %p115 = scmp.eq.s32.totalorder %s15, 1
    %p116 = por %p114, %p115
    %p118 = scmp.ne.s32.totalorder %s101, %s117
    %p119 = scmp.eq.s32.totalorder %s15, 0
    %p120 = por %p118, %p119
    %p121 = scmp.le.s32.totalorder 1, %s9
    %p122 = scmp.lt.s32.totalorder %s9, 3
    %p123 = pnand %p121, %p122
    %p124 = pneg %p123
    // Predicated region
    $region9: #{focal_loss.1} parent=5 // pred_check
      _
    $region10: #{focal_loss.1} parent=5 // pred_check_branch
      %126 = sbr.rel (%p123) target = $region12
    $region11: #{focal_loss.1} parent=5 // pred_region
      %s127 = ssub.s32 %s9, 1
    $region12: #{focal_loss.1} parent=5 // pred_fallthru
      _
    %p128 = scmp.lt.s32.totalorder %s9, 2
    // Predicated region
    $region13: #{focal_loss.1} parent=5 // pred_check
      %p129 = pneg %p128
    $region14: #{focal_loss.1} parent=5 // pred_check_branch
      %131 = sbr.rel (%p129) target = $region16
    $region15: #{focal_loss.1} parent=5 // pred_region
      // Predicated region
      $region17: #{focal_loss.1} parent=15 // pred_check
        %p132 = pneg %p29
      $region18: #{focal_loss.1} parent=15 // pred_check_branch
        %134 = sbr.rel (%p132) target = $region20
      $region19: #{focal_loss.1} parent=15 // pred_region
        %s135 = smul.u32 3, %s9
        %s136 = ssub.s32 5, %s135
        %p137 = scmp.lt.s32.totalorder %s136, 3
        %s138 = scalar_select %p137, %s136, 3
        %s139 = smul.u32 8, %s138
        %p140 = scmp.lt.s32.totalorder %s135, 4
        %s141 = scalar_select %p140, %s135, 4
        %s142 = smul.addr %s141, 8
        %s143 = scalar_lea.vmem %s0, %s142
        %s144 = smul.u32 3, %s9
        %s145 = ssub.s32 5, %s144
        %p146 = scmp.lt.s32.totalorder %s145, 3
        %s147 = scalar_select %p146, %s145, 3
        %s148 = smul.u32 8, %s147
      $region20: #{focal_loss.1} parent=15 // pred_fallthru
        _
      // Predicated region
      $region21: #{focal_loss.1} parent=15 // pred_check
        %p149 = pneg %p55
      $region22: #{focal_loss.1} parent=15 // pred_check_branch
        %151 = sbr.rel (%p149) target = $region24
      $region23: #{focal_loss.1} parent=15 // pred_region
        %s152 = smul.u32 3, %s9
        %p153 = scmp.lt.s32.totalorder %s152, 5
        %s154 = scalar_select %p153, %s152, 5
        %s155 = smul.addr %s154, 8
        %s156 = scalar_lea.vmem %s1, %s155
        %s157 = smul.u32 3, %s9
      $region24: #{focal_loss.1} parent=15 // pred_fallthru
        _
      // Predicated region
      $region25: #{focal_loss.1} parent=15 // pred_check
        %p158 = pneg %p81
      $region26: #{focal_loss.1} parent=15 // pred_check_branch
        %160 = sbr.rel (%p158) target = $region28
      $region27: #{focal_loss.1} parent=15 // pred_region
        %s161 = smul.u32 3, %s9
        %p162 = scmp.lt.s32.totalorder %s161, 5
        %s163 = scalar_select %p162, %s161, 5
        %s164 = smul.addr %s163, 8
        %s165 = scalar_lea.vmem %s2, %s164
        %s166 = smul.u32 3, %s9
      $region28: #{focal_loss.1} parent=15 // pred_fallthru
        _
    $region16: #{focal_loss.1} parent=5 // pred_fallthru
      _
    %p167 = scmp.le.s32.totalorder 1, %s9
    %p168 = scmp.lt.s32.totalorder %s9, 3
    %p169 = pnand %p167, %p168
    %p170 = pneg %p169
    // Predicated region
    $region29: #{focal_loss.1} parent=5 // pred_check
      _
    $region30: #{focal_loss.1} parent=5 // pred_check_branch
      %172 = sbr.rel (%p169) target = $region32
    $region31: #{focal_loss.1} parent=5 // pred_region
      %s173 = ssub.s32 %s9, 1
      %s174 = smul.u32 3, %s14
      %s175 = ssub.s32 5, %s174
      %p176 = scmp.lt.s32.totalorder %s175, 3
      %s177 = scalar_select %p176, %s175, 3
      %s178 = smul.u32 8, %s177
      %p179 = scmp.lt.s32.totalorder %s174, 4
      %s180 = scalar_select %p179, %s174, 4
      %s181 = smul.addr %s180, 8
      %s182 = scalar_lea.vmem %s0, %s181
      %p183 = pneg %p35
      %p184 = pneg %p32
      %s185 = smul.u32 3, %s14
      %p186 = scmp.lt.s32.totalorder %s185, 5
      %s187 = scalar_select %p186, %s185, 5
      %s188 = smul.addr %s187, 8
      %s189 = scalar_lea.vmem %s1, %s188
      %p190 = pneg %p61
      %p191 = pneg %p58
      %s192 = smul.u32 3, %s14
      %p193 = scmp.lt.s32.totalorder %s192, 5
      %s194 = scalar_select %p193, %s192, 5
      %s195 = smul.addr %s194, 8
      %s196 = scalar_lea.vmem %s2, %s195
      %p197 = pneg %p87
      %p198 = pneg %p84
      %p199 = pneg %p113
      %p200 = pneg %p110
      %p201 = scmp.lt.s32.totalorder %s14, 1
      %s202 = scalar_select %p201, %s14, 1
      %s203 = smul.addr %s202, 8
      %s204 = scalar_lea.vmem %s3, %s203
      %s205 = smul.u32 3, %s14
      %s206 = ssub.s32 5, %s205
      %p207 = scmp.lt.s32.totalorder %s206, 3
      %s208 = scalar_select %p207, %s206, 3
      %s209 = smul.u32 8, %s208
      %p210 = scmp.lt.s32.totalorder %s205, 4
      %s211 = scalar_select %p210, %s205, 4
      %s212 = smul.addr %s211, 8
      %s213 = scalar_lea.vmem %s0, %s212
      %s214 = smul.u32 3, %s14
      %s215 = ssub.s32 5, %s214
      %p216 = scmp.lt.s32.totalorder %s215, 3
      %s217 = scalar_select %p216, %s215, 3
      %s218 = smul.u32 8, %s217
      %s219 = smul.u32 3, %s14
      %p220 = scmp.lt.s32.totalorder %s219, 5
      %s221 = scalar_select %p220, %s219, 5
      %s222 = smul.addr %s221, 8
      %s223 = scalar_lea.vmem %s1, %s222
      %s224 = smul.u32 3, %s14
      %s225 = smul.u32 3, %s14
      %p226 = scmp.lt.s32.totalorder %s225, 5
      %s227 = scalar_select %p226, %s225, 5
      %s228 = smul.addr %s227, 8
      %s229 = scalar_lea.vmem %s2, %s228
      %s230 = smul.u32 3, %s14
      %p231 = scmp.lt.s32.totalorder %s14, 1
      %s232 = scalar_select %p231, %s14, 1
      %s233 = smul.addr %s232, 8
      %s234 = scalar_lea.vmem %s3, %s233
      %v235 = vld [vmem:[%s213] sm:$0xff]
      %v236 = vld [vmem:[%s213 + $0x8] sm:$0xff]
      %v237 = vld [vmem:[%s213 + $0x10] sm:$0xff]
      %v238 = vld [vmem:[%s223] sm:$0xff]
      %v239 = vld [vmem:[%s223 + $0x8] sm:$0xff]
      %v240 = vld [vmem:[%s223 + $0x10] sm:$0xff]
      %v241 = vld [vmem:[%s229] sm:$0xff]
      %v242 = vld [vmem:[%s229 + $0x8] sm:$0xff]
      %v243 = vld [vmem:[%s229 + $0x10] sm:$0xff]
      %v244 = vlaneseq
      %v245 = vshrl.u32 %v244, 7
      %v246 = vadd.s32 %v245, 8
      %v247 = vadd.s32 %v245, 16
      %s248 = smul.u32 %s14, 24
      %v249 = vstv %s248
      %v250 = vadd.s32 %v245, %v249
      %v251 = vadd.s32 %v246, %v249
      %v252 = vadd.s32 %v247, %v249
      %vm253 = vcmp.lt.s32.totalorder %v250, 37
      %vm254 = vcmp.lt.s32.totalorder %v251, 37
      %vm255 = vcmp.lt.s32.totalorder %v252, 37
      %v256 = vsel %vm253, 1, 0
      %v257 = vsel %vm254, 1, 0
      %v258 = vsel %vm255, 1, 0
      %vm259 = vcmp.eq.s32.totalorder %v256, 1
      %vm260 = vcmp.eq.s32.totalorder %v257, 1
      %vm261 = vcmp.eq.s32.totalorder %v258, 1
      %v262 = vsel %vm259, %v235, 0.0
      %v263 = vsel %vm260, %v236, 0.0
      %v264 = vsel %vm261, %v237, 0.0
      %vm265 = vcmask 80896
      %v266 = vsel %vm265, %v262, -inf
      %267 = vmax.xlane.f32.xlu0 %v266
      %v268 = vpop.xlane.xlu0 %267
      %v269 = vsel %vm265, %v263, -inf
      %270 = vmax.xlane.f32.xlu0 %v269
      %v271 = vpop.xlane.xlu0 %270
      %v272 = vsel %vm265, %v264, -inf
      %273 = vmax.xlane.f32.xlu0 %v272
      %v274 = vpop.xlane.xlu0 %273
      %v275 = vlaneseq
      %v276 = vand.u32 %v275, 127
      %277 = vset.pattern.permute.xlu0 0
      %278 = vperm.xlu0 %277, %v238
      %v279 = vpop.permute.xlu0 %278
      %280 = vset.pattern.permute.xlu0 0
      %281 = vperm.xlu0 %280, %v239
      %v282 = vpop.permute.xlu0 %281
      %283 = vset.pattern.permute.xlu0 0
      %284 = vperm.xlu0 %283, %v240
      %v285 = vpop.permute.xlu0 %284
      %vm286 = vcmp.eq.s32.totalorder %v276, %v279
      %vm287 = vcmp.eq.s32.totalorder %v276, %v282
      %vm288 = vcmp.eq.s32.totalorder %v276, %v285
      %v289 = vsel %vm286, %v262, 0.0
      %v290 = vsel %vm287, %v263, 0.0
      %v291 = vsel %vm288, %v264, 0.0
      %v292 = vsel %vm265, %v289, 0.0
      %293 = vadd.xlane.f32.xlu0 %v292
      %v294 = vpop.xlane.xlu0 %293
      %v295 = vsel %vm265, %v290, 0.0
      %296 = vadd.xlane.f32.xlu0 %v295
      %v297 = vpop.xlane.xlu0 %296
      %v298 = vsel %vm265, %v291, 0.0
      %299 = vadd.xlane.f32.xlu0 %v298
      %v300 = vpop.xlane.xlu0 %299
      %v301 = vsub.f32 %v262, %v268
      %v302 = vsub.f32 %v263, %v271
      %v303 = vsub.f32 %v264, %v274
      %v304 = vmul.f32 %v301, 1.442695
      %v305 = vpow.pop %v304
      %v306 = vmul.f32 %v302, 1.442695
      %v307 = vpow.pop %v306
      %v308 = vmul.f32 %v303, 1.442695
      %v309 = vpow.pop %v308
      %v310 = vsel %vm265, %v305, 0.0
      %311 = vadd.xlane.f32.xlu0 %v310
      %v312 = vpop.xlane.xlu0 %311
      %v313 = vsel %vm265, %v307, 0.0
      %314 = vadd.xlane.f32.xlu0 %v313
      %v315 = vpop.xlane.xlu0 %314
      %v316 = vsel %vm265, %v309, 0.0
      %317 = vadd.xlane.f32.xlu0 %v316
      %v318 = vpop.xlane.xlu0 %317
      %v319 = vlog2.pop %v312
      %v320 = vmul.f32 %v319, 0.6931472
      %v321 = vlog2.pop %v315
      %v322 = vmul.f32 %v321, 0.6931472
      %v323 = vlog2.pop %v318
      %v324 = vmul.f32 %v323, 0.6931472
      %v325 = vsub.f32 %v294, %v268
      %v326 = vsub.f32 %v297, %v271
      %v327 = vsub.f32 %v300, %v274
      %v328 = vsub.f32 %v325, %v320
      %v329 = vsub.f32 %v326, %v322
      %v330 = vsub.f32 %v327, %v324
      %v331 = vmul.f32 %v328, 1.442695
      %v332 = vpow.pop %v331
      %v333 = vmul.f32 %v329, 1.442695
      %v334 = vpow.pop %v333
      %v335 = vmul.f32 %v330, 1.442695
      %v336 = vpow.pop %v335
      %v337 = vsub.f32 1.0, %v332
      %v338 = vsub.f32 1.0, %v334
      %v339 = vsub.f32 1.0, %v336
      %v340 = vmul.f32 %v337, %v337
      %v341 = vmul.f32 %v338, %v338
      %v342 = vmul.f32 %v339, %v339
      %v343 = vsub.f32 0.0, %v340
      %v344 = vsub.f32 0.0, %v341
      %v345 = vsub.f32 0.0, %v342
      %v346 = vmul.f32 %v343, %v241
      %v347 = vmul.f32 %v344, %v242
      %v348 = vmul.f32 %v345, %v243
      %v349 = vmul.f32 %v346, %v328
      %v350 = vmul.f32 %v347, %v329
      %v351 = vmul.f32 %v348, %v330
      %v352 = vsel %vm253, %v349, 0.0
      %v353 = vsel %vm254, %v350, 0.0
      %v354 = vsel %vm255, %v351, 0.0
      %vm355 = vcmask 7168
      %v356 = vsel %vm355, %v352, 0.0
      %v357 = vsel %vm355, %v353, 0.0
      %v358 = vadd.f32 %v356, %v357
      %v359 = vsel %vm355, %v354, 0.0
      %v360 = vadd.f32 %v358, %v359
      %361 = vadd.xlane.f32.xlu0 %v360
      %v362 = vpop.xlane.xlu0 %361
      %v363 = vrot.slane %v362, 4
      %v364 = vadd.f32 %v362, %v363
      %v365 = vrot.slane %v364, 2
      %v366 = vadd.f32 %v364, %v365
      %v367 = vrot.slane %v366, 1
      %v368 = vadd.f32 %v366, %v367
      %s369 = vtos %v368
      %v370 = vstv %s369
      %371 = vst [vmem:[%s234] sm:$0xff] %v370
      %p372 = scmp.lt.s32.totalorder %s14, 1
      %s373 = scalar_select %p372, %s14, 1
      %s374 = smul.addr %s373, 8
      %s375 = scalar_lea.vmem %s3, %s374
      // Predicated region
      $region33: #{focal_loss.1} parent=31 // pred_check
        %p376 = pneg %p110
      $region34: #{focal_loss.1} parent=31 // pred_check_branch
        %378 = sbr.rel (%p376) target = $region36
      $region35: #{focal_loss.1} parent=31 // pred_region
        _
      $region36: #{focal_loss.1} parent=31 // pred_fallthru
        _
    $region32: #{focal_loss.1} parent=5 // pred_fallthru
      _
    %p379 = scmp.le.s32.totalorder 2, %s9
    // Predicated region
    $region37: #{focal_loss.1} parent=5 // pred_check
      %p380 = pneg %p379
    $region38: #{focal_loss.1} parent=5 // pred_check_branch
      %382 = sbr.rel (%p380) target = $region40
    $region39: #{focal_loss.1} parent=5 // pred_region
      %s383 = ssub.s32 %s9, 2
      // Predicated region
      $region41: #{focal_loss.1} parent=39 // pred_check
        %p384 = pneg %p116
      $region42: #{focal_loss.1} parent=39 // pred_check_branch
        %386 = sbr.rel (%p384) target = $region44
      $region43: #{focal_loss.1} parent=39 // pred_region
        %p387 = scmp.lt.s32.totalorder %s15, 1
        %s388 = scalar_select %p387, %s15, 1
        %s389 = smul.addr %s388, 8
        %s390 = scalar_lea.vmem %s3, %s389
      $region44: #{focal_loss.1} parent=39 // pred_fallthru
        _
    $region40: #{focal_loss.1} parent=5 // pred_fallthru
      _
  $region6: #{focal_loss.1} parent=0 // loop_footer
    %s13 = sadd.s32 1, %s9
  $region7: #{focal_loss.1} parent=0 // loop_footer_branch
    %8 = sbr.rel target = $region3
  $region8: #{focal_loss.1} parent=0 // loop_exit
    _

</llo_original>
